<compile_context>
chip_gen: v6e
topology: v6e:2x2x1
jax: 0.10.0
libtpu: 0.0.40
codegen_flags: <defaults>
</compile_context>

<pallas_src>
import functools
import math

import jax
import jax.numpy as jnp
import numpy as np
from jax.experimental import pallas as pl
from jax.experimental.pallas import tpu as pltpu


# ----------------------------- trace-time (numpy) helpers -----------------------------

def _gaussian_taps_1d(kernel_size: int, sigma: float) -> np.ndarray:
    """Normalized 1-D Gaussian taps. The module's normalized 2-D kernel equals the outer
    product of these taps with themselves, so two 1-D passes reproduce the 2-D conv."""
    coords = np.arange(kernel_size, dtype=np.float64)
    mean = (kernel_size - 1) / 2.0
    g = np.exp(-(((coords - mean) / float(sigma)) ** 2) / 2.0)
    return g / g.sum()


def _reflect_index(idx: int, n: int) -> int:
    """F.pad(mode='reflect') index mapping (requires pad < n)."""
    if idx < 0:
        return -idx
    if idx > n - 1:
        return 2 * (n - 1) - idx
    return idx


def _reflect_conv_operator(n: int, taps: np.ndarray) -> np.ndarray:
    """Dense n x n operator A with A[i, j] = sum of taps mapping input j to output i under
    reflect padding, i.e. (A @ v) == 1-D reflect-padded convolution of v with `taps`."""
    pad = len(taps) // 2
    a = np.zeros((n, n), dtype=np.float64)
    for i in range(n):
        for k, tap in enumerate(taps):
            a[i, _reflect_index(i + k - pad, n)] += tap
    return a


def _choose_plane_block(planes: int, plane_bytes: int, *, max_unroll: int = 8,
                        target_block_bytes: int = 2 << 20, min_steps: int = 4) -> int:
    """Planes per grid step. pb is a leading (non-tiled) block dim, so any divisor of
    `planes` is legal (no ragged edge). Prefer the largest pb that keeps the block in the
    ~1-2 MiB sweet spot, the per-plane unroll short, and >= min_steps grid steps so the
    pipeline overlaps and v7x's 2 TensorCores both get work."""
    divisors = [d for d in range(1, planes + 1) if planes % d == 0]
    fitting = [d for d in divisors
               if d <= max_unroll and d * plane_bytes <= target_block_bytes]
    if not fitting:
        fitting = [1]
    preferred = [d for d in fitting if planes // d >= min_steps]
    return max(preferred) if preferred else min(fitting)


# ------------------------------------ Pallas kernel ------------------------------------

def _smooth_mxu_kernel(x_ref, awt_ref, ah_ref, o_ref, *, plane_block):
    # x_ref : (plane_block, H, W) block of flattened (n, c) planes
    # awt_ref: (W, W)  == A_W^T  (input col j -> output col i)
    # ah_ref : (H, H)  == A_H    (input row h -> output row u)
    awt = awt_ref[...]
    ah = ah_ref[...]
    for p in range(plane_block):                      # short static unroll (<= 8)
        xp = x_ref[p].astype(jnp.float32)             # (H, W)
        t = jnp.dot(xp, awt, preferred_element_type=jnp.float32)   # horizontal pass (MXU)
        y = jnp.dot(ah, t, preferred_element_type=jnp.float32)     # vertical pass   (MXU)
        o_ref[p] = y.astype(o_ref.dtype)


# --------------------------------------- wrapper ---------------------------------------

def gaussian_smoothing_with_pad(x: jnp.ndarray, kernel_size: int, sigma: float) -> jnp.ndarray:
    """Forward pass of GaussianSmoothing_withPad (dim=2) on an NCHW tensor."""
    assert kernel_size % 2 == 1, "odd kernel_size required for same-size output"
    N, C, H, W = x.shape
    pad = kernel_size // 2
    assert pad < H and pad < W, "reflect padding requires pad < spatial size"

    planes = N * C
    taps = _gaussian_taps_1d(kernel_size, sigma)
    awt = jnp.asarray(_reflect_conv_operator(W, taps).T.astype(np.float32))  # (W, W)
    ah = jnp.asarray(_reflect_conv_operator(H, taps).astype(np.float32))     # (H, H)

    plane_bytes = H * W * x.dtype.itemsize
    pb = _choose_plane_block(planes, plane_bytes)
    grid = (planes // pb,)

    x3 = x.reshape(planes, H, W)                      # free reshape, no data movement

    # VMEM budget: double-buffered in/out blocks + double-buffered operators
    # + ~4x block of in-kernel f32 temporaries (cast copy, t, y) + slack.
    blk_f32 = pb * H * W * 4
    est = (4 * pb * plane_bytes) + 2 * (W * W + H * H) * 4 + 4 * blk_f32 + (2 << 20)
    try:
        vmem_cap = int(pltpu.get_tpu_info().vmem_capacity_bytes)
    except Exception:
        vmem_cap = 64 << 20                           # conservative (v7x per-TC physical)
    vmem_limit = int(min(max(est, 16 << 20), (vmem_cap * 3) // 4))

    kernel = functools.partial(_smooth_mxu_kernel, plane_block=pb)

    out3 = pl.pallas_call(
        kernel,
        out_shape=jax.ShapeDtypeStruct((planes, H, W), x.dtype),
        grid_spec=pltpu.PrefetchScalarGridSpec(
            num_scalar_prefetch=0,
            grid=grid,
            in_specs=[
                pl.BlockSpec((pb, H, W), lambda i: (i, 0, 0)),
                pl.BlockSpec((W, W), lambda i: (0, 0)),
                pl.BlockSpec((H, H), lambda i: (0, 0)),
            ],
            out_specs=pl.BlockSpec((pb, H, W), lambda i: (i, 0, 0)),
        ),
        compiler_params=pltpu.CompilerParams(
            dimension_semantics=("parallel",),        # plane blocks shard across v7x's 2 TCs
            vmem_limit_bytes=vmem_limit,
        ),
    )(x3, awt, ah)

    return out3.reshape(N, C, H, W)


# ----------------------------------- pure-JAX reference -----------------------------------

def _gaussian_kernel_2d_np(kernel_size: int, sigma: float) -> np.ndarray:
    """Replicates the module's __init__ 2-D kernel construction (for validation)."""
    coords = np.arange(kernel_size, dtype=np.float32)
    mean = (kernel_size - 1) / 2.0
    g = (1.0 / (sigma * math.sqrt(2.0 * math.pi))) * np.exp(
        -(((coords - mean) / sigma) ** 2) / 2.0)
    k2 = np.outer(g, g).astype(np.float32)
    return (k2 / k2.sum()).astype(np.float32)


def _reference(x, kernel_size, sigma):
    """Reflect pad + depthwise conv (groups=C), exactly like the PyTorch module."""
    N, C, H, W = x.shape
    pad = kernel_size // 2
    xpad = jnp.pad(x, ((0, 0), (0, 0), (pad, pad), (pad, pad)), mode="reflect")
    w2d = _gaussian_kernel_2d_np(kernel_size, sigma)
    weight = jnp.asarray(np.repeat(w2d[None, None], C, axis=0))  # (C,1,ksz,ksz)
    return jax.lax.conv_general_dilated(
        xpad, weight,
        window_strides=(1, 1), padding="VALID",
        dimension_numbers=("NCHW", "OIHW", "NCHW"),
        feature_group_count=C,
    )


if __name__ == "__main__":
    # Module hyperparameters (deterministic, in-script)
    channels = 4
    kernel_size = 5
    sigma = 1.5

    # Small shape matching the module's typical use (batch=2, channels=4, 16x16 spatial).
    key = jax.random.PRNGKey(0)
    x = jax.random.normal(key, (2, channels, 16, 16), dtype=jnp.float32)

    out = gaussian_smoothing_with_pad(x, kernel_size, sigma)
    out = jax.block_until_ready(out)
    ref = _reference(x, kernel_size, sigma)
    assert out.shape == ref.shape == (2, channels, 16, 16)
    np.testing.assert_allclose(np.asarray(out), np.asarray(ref), atol=1e-4, rtol=1e-4)

    # Secondary, non-square check: exercises the multi-step grid / larger MXU tiles.
    x2 = jax.random.normal(jax.random.PRNGKey(1), (2, 2, 96, 128), dtype=jnp.float32)
    out2 = jax.block_until_ready(gaussian_smoothing_with_pad(x2, kernel_size, sigma))
    ref2 = _reference(x2, kernel_size, sigma)
    np.testing.assert_allclose(np.asarray(out2), np.asarray(ref2), atol=1e-4, rtol=1e-4)

    print("KERNEL_OK")
</pallas_src>

<mosaic_0001>
module attributes {stable_mosaic.version = 11 : i64} {
  func.func @_smooth_mxu_kernel(%arg0: i32, %arg1: memref<2x16x16xf32, #tpu.memory_space<vmem>>, %arg2: memref<16x16xf32, #tpu.memory_space<vmem>>, %arg3: memref<16x16xf32, #tpu.memory_space<vmem>>, %arg4: memref<2x16x16xf32, #tpu.memory_space<vmem>>) attributes {dimension_semantics = [#tpu.dimension_semantics<parallel>], iteration_bounds = array<i64: 4>, scalar_prefetch = 0 : i64, scratch_operands = 0 : i64, tpu.core_type = #tpu.core_type<tc>, window_params = [{transform_indices = @transform_0, window_bounds = array<i64: 2, 16, 16>}, {pipeline_mode = #tpu.pipeline_mode<synchronous>, transform_indices = @transform_1, window_bounds = array<i64: 16, 16>}, {pipeline_mode = #tpu.pipeline_mode<synchronous>, transform_indices = @transform_2, window_bounds = array<i64: 16, 16>}, {transform_indices = @transform_3, window_bounds = array<i64: 2, 16, 16>}]} {
    %c0 = arith.constant 0 : index
    %c0_0 = arith.constant 0 : index
    %0 = vector.load %arg2[%c0, %c0_0] : memref<16x16xf32, #tpu.memory_space<vmem>>, vector<16x16xf32>
    %c0_1 = arith.constant 0 : index
    %c0_2 = arith.constant 0 : index
    %1 = vector.load %arg3[%c0_1, %c0_2] : memref<16x16xf32, #tpu.memory_space<vmem>>, vector<16x16xf32>
    %c0_3 = arith.constant 0 : index
    %c0_4 = arith.constant 0 : index
    %c0_5 = arith.constant 0 : index
    %2 = vector.load %arg1[%c0_3, %c0_4, %c0_5] : memref<2x16x16xf32, #tpu.memory_space<vmem>>, vector<1x16x16xf32>
    %3 = vector.shape_cast %2 : vector<1x16x16xf32> to vector<16x16xf32>
    %cst = arith.constant dense<0.000000e+00> : vector<16x16xf32>
    %4 = tpu.matmul %3, %0, %cst {dimension_numbers = #tpu.dot_dimension_numbers<[1], [0], [0], [1], [0, 0, 1, 1], [], []>} : vector<16x16xf32>, vector<16x16xf32>, vector<16x16xf32> -> vector<16x16xf32>
    %cst_6 = arith.constant dense<0.000000e+00> : vector<16x16xf32>
    %5 = tpu.matmul %1, %4, %cst_6 {dimension_numbers = #tpu.dot_dimension_numbers<[1], [0], [0], [1], [0, 0, 1, 1], [], []>} : vector<16x16xf32>, vector<16x16xf32>, vector<16x16xf32> -> vector<16x16xf32>
    %c0_7 = arith.constant 0 : index
    %c0_8 = arith.constant 0 : index
    %c0_9 = arith.constant 0 : index
    %6 = vector.load %arg4[%c0_7, %c0_8, %c0_9] : memref<2x16x16xf32, #tpu.memory_space<vmem>>, vector<1x16x16xf32>
    %7 = vector.shape_cast %6 : vector<1x16x16xf32> to vector<16x16xf32>
    %8 = vector.shape_cast %5 : vector<16x16xf32> to vector<1x16x16xf32>
    tpu.vector_store %arg4[%c0_7, %c0_8, %c0_9], %8 {strides = array<i32>} : memref<2x16x16xf32, #tpu.memory_space<vmem>>, vector<1x16x16xf32>,
    %c1 = arith.constant 1 : index
    %c0_10 = arith.constant 0 : index
    %c0_11 = arith.constant 0 : index
    %9 = vector.load %arg1[%c1, %c0_10, %c0_11] : memref<2x16x16xf32, #tpu.memory_space<vmem>>, vector<1x16x16xf32>
    %10 = vector.shape_cast %9 : vector<1x16x16xf32> to vector<16x16xf32>
    %cst_12 = arith.constant dense<0.000000e+00> : vector<16x16xf32>
    %11 = tpu.matmul %10, %0, %cst_12 {dimension_numbers = #tpu.dot_dimension_numbers<[1], [0], [0], [1], [0, 0, 1, 1], [], []>} : vector<16x16xf32>, vector<16x16xf32>, vector<16x16xf32> -> vector<16x16xf32>
    %cst_13 = arith.constant dense<0.000000e+00> : vector<16x16xf32>
    %12 = tpu.matmul %1, %11, %cst_13 {dimension_numbers = #tpu.dot_dimension_numbers<[1], [0], [0], [1], [0, 0, 1, 1], [], []>} : vector<16x16xf32>, vector<16x16xf32>, vector<16x16xf32> -> vector<16x16xf32>
    %c1_14 = arith.constant 1 : index
    %c0_15 = arith.constant 0 : index
    %c0_16 = arith.constant 0 : index
    %13 = vector.load %arg4[%c1_14, %c0_15, %c0_16] : memref<2x16x16xf32, #tpu.memory_space<vmem>>, vector<1x16x16xf32>
    %14 = vector.shape_cast %13 : vector<1x16x16xf32> to vector<16x16xf32>
    %15 = vector.shape_cast %12 : vector<16x16xf32> to vector<1x16x16xf32>
    tpu.vector_store %arg4[%c1_14, %c0_15, %c0_16], %15 {strides = array<i32>} : memref<2x16x16xf32, #tpu.memory_space<vmem>>, vector<1x16x16xf32>,
    return
  }
  func.func @transform_0(%arg0: i32) -> (i32, i32, i32) {
    %c0_i32 = arith.constant 0 : i32
    %c0_i32_0 = arith.constant 0 : i32
    %c0_i32_1 = arith.constant 0 : i32
    return %arg0, %c0_i32, %c0_i32_0 : i32, i32, i32
  }
  func.func @transform_1(%arg0: i32) -> (i32, i32) {
    %c0_i32 = arith.constant 0 : i32
    %c0_i32_0 = arith.constant 0 : i32
    %c0_i32_1 = arith.constant 0 : i32
    return %c0_i32, %c0_i32_0 : i32, i32
  }
  func.func @transform_2(%arg0: i32) -> (i32, i32) {
    %c0_i32 = arith.constant 0 : i32
    %c0_i32_0 = arith.constant 0 : i32
    %c0_i32_1 = arith.constant 0 : i32
    return %c0_i32, %c0_i32_0 : i32, i32
  }
  func.func @transform_3(%arg0: i32) -> (i32, i32, i32) {
    %c0_i32 = arith.constant 0 : i32
    %c0_i32_0 = arith.constant 0 : i32
    %c0_i32_1 = arith.constant 0 : i32
    return %arg0, %c0_i32, %c0_i32_0 : i32, i32, i32
  }
}

</mosaic_0001>

<llo_original>
// kernel: tpu_custom_call.1
$region0: #{tpu_custom_call.1}
  #allocation0 [shape = 'u32[]', space=smem, size = 0x4, offset = 0x4, fixed_abs, tag = 'smem constant byte address 0x4 - core index']
  #allocation1 [shape = 'u32[144,128]{1,0:T(1,128)}', space=vmem, size = 0x12000, scoped, tag = 'internal scratch']
  %s0 = inlined_call_operand.hbm [shape: f32[8,16,16], index: 0, kind: input, shape index: {}]
  %s1 = inlined_call_operand.hbm [shape: f32[16,16], index: 1, kind: input, shape index: {}]
  %s2 = inlined_call_operand.hbm [shape: f32[16,16], index: 2, kind: input, shape index: {}]
  %s3 = inlined_call_operand.hbm [shape: f32[8,16,16], index: 3, kind: output, shape index: {}]
  %s4 = sld [smem:[#allocation0]]
  $region57: #{tpu_custom_call.1} parent=0
    _
  %s6 = ssub.s32 1, %s4
  %s7 = scalar_select 0, %s6, %s4
  $region1: #{tpu_custom_call.1} parent=0
    #allocation2 [shape = 'u8[32768]{0}', space=vmem, size = 0x8000, scoped, tag = 'input window, operand 0']
    #allocation3 [shape = 's32[2]{0}', space=sflag, size = 0x8, scoped, tag = 'scoped memory for tpu_custom_call.1']
    #allocation4 [shape = 's32[2]{0}', space=sflag, size = 0x8, scoped, tag = 'scoped memory for tpu_custom_call.1']
    #allocation5 [shape = 'u8[8192]{0}', space=vmem, size = 0x2000, scoped, tag = 'input window, operand 1, single buffered']
    #allocation6 [shape = 's32[1]{0}', space=sflag, size = 0x4, scoped, tag = 'scoped memory for tpu_custom_call.1']
    #allocation7 [shape = 'u8[8192]{0}', space=vmem, size = 0x2000, scoped, tag = 'input window, operand 2, single buffered']
    #allocation8 [shape = 'u8[32768]{0}', space=vmem, size = 0x8000, scoped, tag = 'output window, operand 0']
    %8 = vsyncpa [#allocation3], 0
    %s9 = scalar_lea.sflag [#allocation3], 1
    %10 = vsyncpa %s9, 0
    %11 = vsyncpa [#allocation6], 0
    %12 = vsyncpa [#allocation4], 0
    %s13 = scalar_lea.sflag [#allocation4], 1
    %14 = vsyncpa %s13, 0
    loop: start=0, step=1, limit=6
    $region2: #{tpu_custom_call.1} parent=1 // loop_pre_header
      _
    $region3: #{tpu_custom_call.1} parent=1 // loop_header
      %s16 = sphi 0, %s20
      %p17 = scmp.ge.s32.totalorder %s16, 6
      %s26 = sphi 0, %s28
      %s29 = sphi 0, %s26
      %s30 = sphi 0, %s29
      %s46 = sphi 0, %s30
      %s50 = sphi 0, %s50
      %s52 = sphi 0, %s50
      %s53 = sphi 0, %s52
      %s67 = sphi 0, %s53
      %s71 = sphi 0, %s71
      %s73 = sphi 0, %s71
      %s74 = sphi 0, %s73
      %s88 = sphi 0, %s74
      %s94 = sphi 0, %s96
      %s97 = sphi 0, %s94
      %s98 = sphi 0, %s97
      %s114 = sphi 0, %s98
    $region4: #{tpu_custom_call.1} parent=1 // loop_header_branch
      %19 = sbr.rel (%p17) target = $region8
    $region5: #{tpu_custom_call.1} parent=1 // loop_body
      %s21 = ssub.s32 %s16, 1
      %s22 = ssub.s32 %s16, 2
      %s23 = sadd.s32 %s16, 1
      %s24 = ssub.s32 %s16, %s23
      %p25 = scmp.eq.s32.totalorder %s24, 0
      %s27 = sadd.s32 %s26, 1
      %s28 = scalar_select %p25, %s26, %s27
      %p31 = pneg %p25
      %p32 = scmp.eq.s32.totalorder %s16, 3
      %p33 = por %p31, %p32
      %p34 = scmp.ne.s32.totalorder %s26, %s29
      %p35 = scmp.eq.s32.totalorder %s16, 0
      %p36 = por %p34, %p35
      %p37 = scmp.ne.s32.totalorder %s26, %s29
      %p38 = scmp.eq.s32.totalorder %s21, 3
      %p39 = por %p37, %p38
      %p40 = scmp.ne.s32.totalorder %s29, %s30
      %p41 = scmp.eq.s32.totalorder %s21, 0
      %p42 = por %p40, %p41
      %p43 = scmp.ne.s32.totalorder %s29, %s30
      %p44 = scmp.eq.s32.totalorder %s22, 3
      %p45 = por %p43, %p44
      %p47 = scmp.ne.s32.totalorder %s30, %s46
      %p48 = scmp.eq.s32.totalorder %s22, 0
      %p49 = por %p47, %p48
      %s51 = sadd.s32 %s50, 1
      %p54 = scmp.eq.s32.totalorder %s16, 3
      %p55 = scmp.ne.s32.totalorder %s50, %s52
      %p56 = scmp.eq.s32.totalorder %s16, 0
      %p57 = por %p55, %p56
      %p58 = scmp.ne.s32.totalorder %s50, %s52
      %p59 = scmp.eq.s32.totalorder %s21, 3
      %p60 = por %p58, %p59
      %p61 = scmp.ne.s32.totalorder %s52, %s53
      %p62 = scmp.eq.s32.totalorder %s21, 0
      %p63 = por %p61, %p62
      %p64 = scmp.ne.s32.totalorder %s52, %s53
      %p65 = scmp.eq.s32.totalorder %s22, 3
      %p66 = por %p64, %p65
      %p68 = scmp.ne.s32.totalorder %s53, %s67
      %p69 = scmp.eq.s32.totalorder %s22, 0
      %p70 = por %p68, %p69
      %s72 = sadd.s32 %s71, 1
      %p75 = scmp.eq.s32.totalorder %s16, 3
      %p76 = scmp.ne.s32.totalorder %s71, %s73
      %p77 = scmp.eq.s32.totalorder %s16, 0
      %p78 = por %p76, %p77
      %p79 = scmp.ne.s32.totalorder %s71, %s73
      %p80 = scmp.eq.s32.totalorder %s21, 3
      %p81 = por %p79, %p80
      %p82 = scmp.ne.s32.totalorder %s73, %s74
      %p83 = scmp.eq.s32.totalorder %s21, 0
      %p84 = por %p82, %p83
      %p85 = scmp.ne.s32.totalorder %s73, %s74
      %p86 = scmp.eq.s32.totalorder %s22, 3
      %p87 = por %p85, %p86
      %p89 = scmp.ne.s32.totalorder %s74, %s88
      %p90 = scmp.eq.s32.totalorder %s22, 0
      %p91 = por %p89, %p90
      %s92 = ssub.s32 %s16, %s23
      %p93 = scmp.eq.s32.totalorder %s92, 0
      %s95 = sadd.s32 %s94, 1
      %s96 = scalar_select %p93, %s94, %s95
      %p99 = pneg %p93
      %p100 = scmp.eq.s32.totalorder %s16, 3
      %p101 = por %p99, %p100
      %p102 = scmp.ne.s32.totalorder %s94, %s97
      %p103 = scmp.eq.s32.totalorder %s16, 0
      %p104 = por %p102, %p103
      %p105 = scmp.ne.s32.totalorder %s94, %s97
      %p106 = scmp.eq.s32.totalorder %s21, 3
      %p107 = por %p105, %p106
      %p108 = scmp.ne.s32.totalorder %s97, %s98
      %p109 = scmp.eq.s32.totalorder %s21, 0
      %p110 = por %p108, %p109
      %p111 = scmp.ne.s32.totalorder %s97, %s98
      %p112 = scmp.eq.s32.totalorder %s22, 3
      %p113 = por %p111, %p112
      %p115 = scmp.ne.s32.totalorder %s98, %s114
      %p116 = scmp.eq.s32.totalorder %s22, 0
      %p117 = por %p115, %p116
      %p118 = scmp.le.s32.totalorder 1, %s16
      %p119 = scmp.lt.s32.totalorder %s16, 5
      %p120 = pnand %p118, %p119
      %p121 = pneg %p120
      // Predicated region
      $region9: #{tpu_custom_call.1} parent=5 // pred_check
        _
      $region10: #{tpu_custom_call.1} parent=5 // pred_check_branch
        %123 = sbr.rel (%p120) target = $region12
      $region11: #{tpu_custom_call.1} parent=5 // pred_region
        %s124 = ssub.s32 %s16, 1
        // Predicated region
        $region13: #{tpu_custom_call.1} parent=11 // pred_check
          %p125 = pneg %p63
        $region14: #{tpu_custom_call.1} parent=11 // pred_check_branch
          %127 = sbr.rel (%p125) target = $region16
        $region15: #{tpu_custom_call.1} parent=11 // pred_region
          %s129 = ssub.s32 256, 256
          %130 = vsyncadd [#allocation6], %s129
          %s131 = sshll.u32 [#allocation5], 4
          %s132 = int_to_ptr.vmem [resolvable:$true] %s131
          %137 = dma.hbm_to_vmem [thread:$0]  %s1, 256, %s132, [#allocation6], 128, 128, 8
        $region16: #{tpu_custom_call.1} parent=11 // pred_fallthru
          _
        // Predicated region
        $region17: #{tpu_custom_call.1} parent=11 // pred_check
          %p138 = pneg %p84
        $region18: #{tpu_custom_call.1} parent=11 // pred_check_branch
          %140 = sbr.rel (%p138) target = $region20
        $region19: #{tpu_custom_call.1} parent=11 // pred_region
          %s142 = ssub.s32 256, 256
          %143 = vsyncadd [#allocation6], %s142
          %s144 = sshll.u32 [#allocation7], 4
          %s145 = int_to_ptr.vmem [resolvable:$true] %s144
          %150 = dma.hbm_to_vmem [thread:$0]  %s2, 256, %s145, [#allocation6], 128, 128, 8
        $region20: #{tpu_custom_call.1} parent=11 // pred_fallthru
          _
      $region12: #{tpu_custom_call.1} parent=5 // pred_fallthru
        _
      %p151 = scmp.lt.s32.totalorder %s16, 4
      // Predicated region
      $region21: #{tpu_custom_call.1} parent=5 // pred_check
        %p152 = pneg %p151
      $region22: #{tpu_custom_call.1} parent=5 // pred_check_branch
        %154 = sbr.rel (%p152) target = $region24
      $region23: #{tpu_custom_call.1} parent=5 // pred_region
        // Predicated region
        $region25: #{tpu_custom_call.1} parent=23 // pred_check
          %p155 = pneg %p36
        $region26: #{tpu_custom_call.1} parent=23 // pred_check_branch
          %157 = sbr.rel (%p155) target = $region28
        $region27: #{tpu_custom_call.1} parent=23 // pred_region
          %s158 = sand.u32 %s26, 1
          %s159 = scalar_lea.sflag [#allocation3], %s158
          %s160 = sand.u32 %s26, 1
          %s161 = smul.addr %s160, 32
          %s162 = scalar_lea.vmem [#allocation2], %s161
          %s163 = smul.u32 2, %s16
          %s165 = ssub.s32 512, 512
          %166 = vsyncadd %s159, %s165
          %s167 = smul.addr %s163, 2
          %s168 = smul.addr %s167, 128
          %s169 = scalar_lea.hbm %s0, %s168
          %s170 = sshll.u32 %s162, 4
          %s171 = int_to_ptr.vmem [resolvable:$true] %s170
          %176 = dma.hbm_to_vmem [thread:$0]  %s169, 512, %s171, %s159, 128, 128, 8
        $region28: #{tpu_custom_call.1} parent=23 // pred_fallthru
          _
      $region24: #{tpu_custom_call.1} parent=5 // pred_fallthru
        _
      %p177 = scmp.le.s32.totalorder 1, %s16
      %p178 = scmp.lt.s32.totalorder %s16, 5
      %p179 = pnand %p177, %p178
      %p180 = pneg %p179
      // Predicated region
      $region29: #{tpu_custom_call.1} parent=5 // pred_check
        _
      $region30: #{tpu_custom_call.1} parent=5 // pred_check_branch
        %182 = sbr.rel (%p179) target = $region32
      $region31: #{tpu_custom_call.1} parent=5 // pred_region
        %s183 = ssub.s32 %s16, 1
        %s184 = sand.u32 %s29, 1
        %s185 = scalar_lea.sflag [#allocation3], %s184
        %s186 = sand.u32 %s29, 1
        %s187 = smul.addr %s186, 32
        %s188 = scalar_lea.vmem [#allocation2], %s187
        // Predicated region
        $region33: #{tpu_custom_call.1} parent=31 // pred_check
          %p189 = pneg %p42
        $region34: #{tpu_custom_call.1} parent=31 // pred_check_branch
          %191 = sbr.rel (%p189) target = $region36
        $region35: #{tpu_custom_call.1} parent=31 // pred_region
          %192 = dma.done %s185, 512
        $region36: #{tpu_custom_call.1} parent=31 // pred_fallthru
          _
        // Predicated region
        $region37: #{tpu_custom_call.1} parent=31 // pred_check
          %p193 = pneg %p63
        $region38: #{tpu_custom_call.1} parent=31 // pred_check_branch
          %195 = sbr.rel (%p193) target = $region40
        $region39: #{tpu_custom_call.1} parent=31 // pred_region
          %196 = dma.done [#allocation6], 256
        $region40: #{tpu_custom_call.1} parent=31 // pred_fallthru
          _
        // Predicated region
        $region41: #{tpu_custom_call.1} parent=31 // pred_check
          %p197 = pneg %p84
        $region42: #{tpu_custom_call.1} parent=31 // pred_check_branch
          %199 = sbr.rel (%p197) target = $region44
        $region43: #{tpu_custom_call.1} parent=31 // pred_region
          %200 = dma.done [#allocation6], 256
        $region44: #{tpu_custom_call.1} parent=31 // pred_fallthru
          _
        %s201 = sand.u32 %s29, 1
        %s202 = scalar_lea.sflag [#allocation3], %s201
        %s203 = sand.u32 %s29, 1
        %s204 = smul.addr %s203, 32
        %s205 = scalar_lea.vmem [#allocation2], %s204
        %p206 = pneg %p42
        %p207 = pneg %p39
        %p208 = pneg %p63
        %p209 = pneg %p60
        %p210 = pneg %p84
        %p211 = pneg %p81
        %p212 = pneg %p110
        %p213 = pneg %p107
        %s214 = sand.u32 %s97, 1
        %s215 = scalar_lea.sflag [#allocation4], %s214
        %s216 = sand.u32 %s97, 1
        %s217 = smul.addr %s216, 32
        %s218 = scalar_lea.vmem [#allocation8], %s217
        %s219 = smul.u32 2, %s21
        %s220 = smul.u32 2, %s21
        %v221 = vld [vmem:[#allocation5] sm:$0xff]
        %v222 = vld [vmem:[#allocation5 + $0x8] sm:$0xff]
        %v223 = vld [vmem:[#allocation7] sm:$0xff]
        %v224 = vld [vmem:[#allocation7 + $0x8] sm:$0xff]
        %v225 = vld [vmem:[%s188] sm:$0xff]
        %v226 = vld [vmem:[%s188 + $0x8] sm:$0xff]
        %vm227 = vcmask 130048
        %v229 = vsel %vm227, %v225, 0
        %v232 = vsel %vm227, %v226, 0
        %234 = vmatprep.subr.mxu0 0.0
        %235 = vmatpush1.msra.mxu0 0.0
        %236 = vmatprep.subr.mxu0 0.0
        %237 = vmatpush1.msra.mxu0 0.0
        %238 = vmatprep.subr.mxu0 0.0
        %239 = vmatpush1.msra.mxu0 0.0
        %240 = vmatprep.subr.mxu0 0.0
        %241 = vmatpush1.msra.mxu0 0.0
        %242 = vmatprep.subr.mxu0 0.0
        %243 = vmatpush1.msra.mxu0 0.0
        %244 = vmatprep.subr.mxu0 0.0
        %245 = vmatpush1.msra.mxu0 0.0
        %246 = vmatprep.subr.mxu0 0.0
        %247 = vmatpush1.msra.mxu0 0.0
        %248 = vmatprep.subr.mxu0 0.0
        %249 = vmatpush1.msra.mxu0 0.0
        %250 = vmatprep.subr.mxu0 0.0
        %251 = vmatpush1.msra.mxu0 0.0
        %252 = vmatprep.subr.mxu0 0.0
        %253 = vmatpush1.msra.mxu0 0.0
        %254 = vmatprep.subr.mxu0 0.0
        %255 = vmatpush1.msra.mxu0 0.0
        %256 = vmatprep.subr.mxu0 0.0
        %257 = vmatpush1.msra.mxu0 0.0
        %258 = vmatprep.subr.mxu0 0.0
        %259 = vmatpush1.msra.mxu0 0.0
        %260 = vmatprep.subr.mxu0 0.0
        %261 = vmatpush1.msra.mxu0 0.0
        %262 = vmatprep.subr.mxu0 0.0
        %263 = vmatpush1.msra.mxu0 %v222
        %264 = vmatprep.subr.mxu0 0.0
        %265 = vmatpush1.msra.mxu0 %v221
        %266 = vmatprep.subr.mxu0 0.0
        %267 = vmatpush2.msra.mxu0 0.0
        %268 = vmatprep.subr.mxu0 0.0
        %269 = vmatpush2.msra.mxu0 0.0
        %270 = vmatprep.subr.mxu0 0.0
        %271 = vmatpush2.msra.mxu0 0.0
        %272 = vmatprep.subr.mxu0 0.0
        %273 = vmatpush2.msra.mxu0 0.0
        %274 = vmatprep.subr.mxu0 0.0
        %275 = vmatpush2.msra.mxu0 0.0
        %276 = vmatprep.subr.mxu0 0.0
        %277 = vmatpush2.msra.mxu0 0.0
        %278 = vmatprep.subr.mxu0 0.0
        %279 = vmatpush2.msra.mxu0 0.0
        %280 = vmatprep.subr.mxu0 0.0
        %281 = vmatpush2.msra.mxu0 0.0
        %282 = vmatprep.subr.mxu0 0.0
        %283 = vmatpush2.msra.mxu0 0.0
        %284 = vmatprep.subr.mxu0 0.0
        %285 = vmatpush2.msra.mxu0 0.0
        %286 = vmatprep.subr.mxu0 0.0
        %287 = vmatpush2.msra.mxu0 0.0
        %288 = vmatprep.subr.mxu0 0.0
        %289 = vmatpush2.msra.mxu0 0.0
        %290 = vmatprep.subr.mxu0 0.0
        %291 = vmatpush2.msra.mxu0 0.0
        %292 = vmatprep.subr.mxu0 0.0
        %293 = vmatpush2.msra.mxu0 0.0
        %294 = vmatprep.subr.mxu0 0.0
        %295 = vmatpush2.msra.mxu0 0.0
        %296 = vmatprep.subr.mxu0 0.0
        %297 = vmatpush2.msra.mxu0 0.0
        %298 = vmatprep.mubr.f32.mxu0 0.0
        %299 = vmatmul.mubr.f32.gmra.mxu0 %v229
        %v300 = vpop.f32.mrf.mxu0
        %v301 = vadd.f32 0.0, %v300
        %v302 = vpop.f32.mrf.mxu0
        %303 = vmatprep.mubr.f32.mxu0 0.0
        %304 = vmatmul.mubr.f32.gmra.mxu0 %v232
        %v305 = vpop.f32.mrf.mxu0
        %v306 = vadd.f32 0.0, %v305
        %v307 = vpop.f32.mrf.mxu0
        %308 = vdwg.mxu0
        %v310 = vsel %vm227, %v223, 0
        %v313 = vsel %vm227, %v224, 0
        %315 = vmatprep.subr.mxu0 0.0
        %316 = vmatpush1.msra.mxu0 0.0
        %317 = vmatprep.subr.mxu0 0.0
        %318 = vmatpush1.msra.mxu0 0.0
        %319 = vmatprep.subr.mxu0 0.0
        %320 = vmatpush1.msra.mxu0 0.0
        %321 = vmatprep.subr.mxu0 0.0
        %322 = vmatpush1.msra.mxu0 0.0
        %323 = vmatprep.subr.mxu0 0.0
        %324 = vmatpush1.msra.mxu0 0.0
        %325 = vmatprep.subr.mxu0 0.0
        %326 = vmatpush1.msra.mxu0 0.0
        %327 = vmatprep.subr.mxu0 0.0
        %328 = vmatpush1.msra.mxu0 0.0
        %329 = vmatprep.subr.mxu0 0.0
        %330 = vmatpush1.msra.mxu0 0.0
        %331 = vmatprep.subr.mxu0 0.0
        %332 = vmatpush1.msra.mxu0 0.0
        %333 = vmatprep.subr.mxu0 0.0
        %334 = vmatpush1.msra.mxu0 0.0
        %335 = vmatprep.subr.mxu0 0.0
        %336 = vmatpush1.msra.mxu0 0.0
        %337 = vmatprep.subr.mxu0 0.0
        %338 = vmatpush1.msra.mxu0 0.0
        %339 = vmatprep.subr.mxu0 0.0
        %340 = vmatpush1.msra.mxu0 0.0
        %341 = vmatprep.subr.mxu0 0.0
        %342 = vmatpush1.msra.mxu0 0.0
        %343 = vmatprep.subr.mxu0 0.0
        %344 = vmatpush1.msra.mxu0 %v306
        %345 = vmatprep.subr.mxu0 0.0
        %346 = vmatpush1.msra.mxu0 %v301
        %347 = vmatprep.subr.mxu0 0.0
        %348 = vmatpush2.msra.mxu0 0.0
        %349 = vmatprep.subr.mxu0 0.0
        %350 = vmatpush2.msra.mxu0 0.0
        %351 = vmatprep.subr.mxu0 0.0
        %352 = vmatpush2.msra.mxu0 0.0
        %353 = vmatprep.subr.mxu0 0.0
        %354 = vmatpush2.msra.mxu0 0.0
        %355 = vmatprep.subr.mxu0 0.0
        %356 = vmatpush2.msra.mxu0 0.0
        %357 = vmatprep.subr.mxu0 0.0
        %358 = vmatpush2.msra.mxu0 0.0
        %359 = vmatprep.subr.mxu0 0.0
        %360 = vmatpush2.msra.mxu0 0.0
        %361 = vmatprep.subr.mxu0 0.0
        %362 = vmatpush2.msra.mxu0 0.0
        %363 = vmatprep.subr.mxu0 0.0
        %364 = vmatpush2.msra.mxu0 0.0
        %365 = vmatprep.subr.mxu0 0.0
        %366 = vmatpush2.msra.mxu0 0.0
        %367 = vmatprep.subr.mxu0 0.0
        %368 = vmatpush2.msra.mxu0 0.0
        %369 = vmatprep.subr.mxu0 0.0
        %370 = vmatpush2.msra.mxu0 0.0
        %371 = vmatprep.subr.mxu0 0.0
        %372 = vmatpush2.msra.mxu0 0.0
        %373 = vmatprep.subr.mxu0 0.0
        %374 = vmatpush2.msra.mxu0 0.0
        %375 = vmatprep.subr.mxu0 0.0
        %376 = vmatpush2.msra.mxu0 0.0
        %377 = vmatprep.subr.mxu0 0.0
        %378 = vmatpush2.msra.mxu0 0.0
        %379 = vmatprep.mubr.f32.mxu0 0.0
        %380 = vmatmul.mubr.f32.gmra.mxu0 %v310
        %v381 = vpop.f32.mrf.mxu0
        %v382 = vadd.f32 0.0, %v381
        %v383 = vpop.f32.mrf.mxu0
        %384 = vmatprep.mubr.f32.mxu0 0.0
        %385 = vmatmul.mubr.f32.gmra.mxu0 %v313
        %v386 = vpop.f32.mrf.mxu0
        %v387 = vadd.f32 0.0, %v386
        %v388 = vpop.f32.mrf.mxu0
        %389 = vdwg.mxu0
        %390 = vst.msk [vmem:[%s218] sm:$0xff] %vm227, %v382
        %391 = vst.msk [vmem:[%s218 + $0x8] sm:$0xff] %vm227, %v387
        %s392 = scalar_lea.vmem %s188, 16 [#allocation2]
        %v393 = vld [vmem:[%s392] sm:$0xff]
        %v394 = vld [vmem:[%s392 + $0x8] sm:$0xff]
        %v396 = vsel %vm227, %v393, 0
        %v399 = vsel %vm227, %v394, 0
        %401 = vmatprep.subr.mxu0 0.0
        %402 = vmatpush1.msra.mxu0 0.0
        %403 = vmatprep.subr.mxu0 0.0
        %404 = vmatpush1.msra.mxu0 0.0
        %405 = vmatprep.subr.mxu0 0.0
        %406 = vmatpush1.msra.mxu0 0.0
        %407 = vmatprep.subr.mxu0 0.0
        %408 = vmatpush1.msra.mxu0 0.0
        %409 = vmatprep.subr.mxu0 0.0
        %410 = vmatpush1.msra.mxu0 0.0
        %411 = vmatprep.subr.mxu0 0.0
        %412 = vmatpush1.msra.mxu0 0.0
        %413 = vmatprep.subr.mxu0 0.0
        %414 = vmatpush1.msra.mxu0 0.0
        %415 = vmatprep.subr.mxu0 0.0
        %416 = vmatpush1.msra.mxu0 0.0
        %417 = vmatprep.subr.mxu0 0.0
        %418 = vmatpush1.msra.mxu0 0.0
        %419 = vmatprep.subr.mxu0 0.0
        %420 = vmatpush1.msra.mxu0 0.0
        %421 = vmatprep.subr.mxu0 0.0
        %422 = vmatpush1.msra.mxu0 0.0
        %423 = vmatprep.subr.mxu0 0.0
        %424 = vmatpush1.msra.mxu0 0.0
        %425 = vmatprep.subr.mxu0 0.0
        %426 = vmatpush1.msra.mxu0 0.0
        %427 = vmatprep.subr.mxu0 0.0
        %428 = vmatpush1.msra.mxu0 0.0
        %429 = vmatprep.subr.mxu0 0.0
        %430 = vmatpush1.msra.mxu0 %v222
        %431 = vmatprep.subr.mxu0 0.0
        %432 = vmatpush1.msra.mxu0 %v221
        %433 = vmatprep.subr.mxu0 0.0
        %434 = vmatpush2.msra.mxu0 0.0
        %435 = vmatprep.subr.mxu0 0.0
        %436 = vmatpush2.msra.mxu0 0.0
        %437 = vmatprep.subr.mxu0 0.0
        %438 = vmatpush2.msra.mxu0 0.0
        %439 = vmatprep.subr.mxu0 0.0
        %440 = vmatpush2.msra.mxu0 0.0
        %441 = vmatprep.subr.mxu0 0.0
        %442 = vmatpush2.msra.mxu0 0.0
        %443 = vmatprep.subr.mxu0 0.0
        %444 = vmatpush2.msra.mxu0 0.0
        %445 = vmatprep.subr.mxu0 0.0
        %446 = vmatpush2.msra.mxu0 0.0
        %447 = vmatprep.subr.mxu0 0.0
        %448 = vmatpush2.msra.mxu0 0.0
        %449 = vmatprep.subr.mxu0 0.0
        %450 = vmatpush2.msra.mxu0 0.0
        %451 = vmatprep.subr.mxu0 0.0
        %452 = vmatpush2.msra.mxu0 0.0
        %453 = vmatprep.subr.mxu0 0.0
        %454 = vmatpush2.msra.mxu0 0.0
        %455 = vmatprep.subr.mxu0 0.0
        %456 = vmatpush2.msra.mxu0 0.0
        %457 = vmatprep.subr.mxu0 0.0
        %458 = vmatpush2.msra.mxu0 0.0
        %459 = vmatprep.subr.mxu0 0.0
        %460 = vmatpush2.msra.mxu0 0.0
        %461 = vmatprep.subr.mxu0 0.0
        %462 = vmatpush2.msra.mxu0 0.0
        %463 = vmatprep.subr.mxu0 0.0
        %464 = vmatpush2.msra.mxu0 0.0
        %465 = vmatprep.mubr.f32.mxu0 0.0
        %466 = vmatmul.mubr.f32.gmra.mxu0 %v396
        %v467 = vpop.f32.mrf.mxu0
        %v468 = vadd.f32 0.0, %v467
        %v469 = vpop.f32.mrf.mxu0
        %470 = vmatprep.mubr.f32.mxu0 0.0
        %471 = vmatmul.mubr.f32.gmra.mxu0 %v399
        %v472 = vpop.f32.mrf.mxu0
        %v473 = vadd.f32 0.0, %v472
        %v474 = vpop.f32.mrf.mxu0
        %475 = vdwg.mxu0
        %476 = vmatprep.subr.mxu0 0.0
        %477 = vmatpush1.msra.mxu0 0.0
        %478 = vmatprep.subr.mxu0 0.0
        %479 = vmatpush1.msra.mxu0 0.0
        %480 = vmatprep.subr.mxu0 0.0
        %481 = vmatpush1.msra.mxu0 0.0
        %482 = vmatprep.subr.mxu0 0.0
        %483 = vmatpush1.msra.mxu0 0.0
        %484 = vmatprep.subr.mxu0 0.0
        %485 = vmatpush1.msra.mxu0 0.0
        %486 = vmatprep.subr.mxu0 0.0
        %487 = vmatpush1.msra.mxu0 0.0
        %488 = vmatprep.subr.mxu0 0.0
        %489 = vmatpush1.msra.mxu0 0.0
        %490 = vmatprep.subr.mxu0 0.0
        %491 = vmatpush1.msra.mxu0 0.0
        %492 = vmatprep.subr.mxu0 0.0
        %493 = vmatpush1.msra.mxu0 0.0
        %494 = vmatprep.subr.mxu0 0.0
        %495 = vmatpush1.msra.mxu0 0.0
        %496 = vmatprep.subr.mxu0 0.0
        %497 = vmatpush1.msra.mxu0 0.0
        %498 = vmatprep.subr.mxu0 0.0
        %499 = vmatpush1.msra.mxu0 0.0
        %500 = vmatprep.subr.mxu0 0.0
        %501 = vmatpush1.msra.mxu0 0.0
        %502 = vmatprep.subr.mxu0 0.0
        %503 = vmatpush1.msra.mxu0 0.0
        %504 = vmatprep.subr.mxu0 0.0
        %505 = vmatpush1.msra.mxu0 %v473
        %506 = vmatprep.subr.mxu0 0.0
        %507 = vmatpush1.msra.mxu0 %v468
        %508 = vmatprep.subr.mxu0 0.0
        %509 = vmatpush2.msra.mxu0 0.0
        %510 = vmatprep.subr.mxu0 0.0
        %511 = vmatpush2.msra.mxu0 0.0
        %512 = vmatprep.subr.mxu0 0.0
        %513 = vmatpush2.msra.mxu0 0.0
        %514 = vmatprep.subr.mxu0 0.0
        %515 = vmatpush2.msra.mxu0 0.0
        %516 = vmatprep.subr.mxu0 0.0
        %517 = vmatpush2.msra.mxu0 0.0
        %518 = vmatprep.subr.mxu0 0.0
        %519 = vmatpush2.msra.mxu0 0.0
        %520 = vmatprep.subr.mxu0 0.0
        %521 = vmatpush2.msra.mxu0 0.0
        %522 = vmatprep.subr.mxu0 0.0
        %523 = vmatpush2.msra.mxu0 0.0
        %524 = vmatprep.subr.mxu0 0.0
        %525 = vmatpush2.msra.mxu0 0.0
        %526 = vmatprep.subr.mxu0 0.0
        %527 = vmatpush2.msra.mxu0 0.0
        %528 = vmatprep.subr.mxu0 0.0
        %529 = vmatpush2.msra.mxu0 0.0
        %530 = vmatprep.subr.mxu0 0.0
        %531 = vmatpush2.msra.mxu0 0.0
        %532 = vmatprep.subr.mxu0 0.0
        %533 = vmatpush2.msra.mxu0 0.0
        %534 = vmatprep.subr.mxu0 0.0
        %535 = vmatpush2.msra.mxu0 0.0
        %536 = vmatprep.subr.mxu0 0.0
        %537 = vmatpush2.msra.mxu0 0.0
        %538 = vmatprep.subr.mxu0 0.0
        %539 = vmatpush2.msra.mxu0 0.0
        %540 = vmatprep.mubr.f32.mxu0 0.0
        %541 = vmatmul.mubr.f32.gmra.mxu0 %v310
        %v542 = vpop.f32.mrf.mxu0
        %v543 = vadd.f32 0.0, %v542
        %v544 = vpop.f32.mrf.mxu0
        %545 = vmatprep.mubr.f32.mxu0 0.0
        %546 = vmatmul.mubr.f32.gmra.mxu0 %v313
        %v547 = vpop.f32.mrf.mxu0
        %v548 = vadd.f32 0.0, %v547
        %v549 = vpop.f32.mrf.mxu0
        %550 = vdwg.mxu0
        %s551 = scalar_lea.vmem %s218, 16 [#allocation8]
        %552 = vst.msk [vmem:[%s551] sm:$0xff] %vm227, %v543
        %553 = vst.msk [vmem:[%s551 + $0x8] sm:$0xff] %vm227, %v548
        %s554 = sand.u32 %s97, 1
        %s555 = scalar_lea.sflag [#allocation4], %s554
        %s556 = sand.u32 %s97, 1
        %s557 = smul.addr %s556, 32
        %s558 = scalar_lea.vmem [#allocation8], %s557
        // Predicated region
        $region45: #{tpu_custom_call.1} parent=31 // pred_check
          %p559 = pneg %p107
        $region46: #{tpu_custom_call.1} parent=31 // pred_check_branch
          %561 = sbr.rel (%p559) target = $region48
        $region47: #{tpu_custom_call.1} parent=31 // pred_region
          %s562 = smul.u32 2, %s21
          %s564 = ssub.s32 512, 512
          %565 = vsyncadd %s555, %s564
          %s566 = smul.addr %s562, 2
          %s567 = smul.addr %s566, 128
          %s568 = scalar_lea.hbm %s3, %s567
          %s569 = sshll.u32 %s558, 4
          %s570 = int_to_ptr.vmem [resolvable:$true] %s569
          %575 = dma.vmem_to_hbm [thread:$0]  %s570, 512, %s568, %s555, 128, 128, 8
        $region48: #{tpu_custom_call.1} parent=31 // pred_fallthru
          _
      $region32: #{tpu_custom_call.1} parent=5 // pred_fallthru
        _
      %p576 = scmp.le.s32.totalorder 2, %s16
      // Predicated region
      $region49: #{tpu_custom_call.1} parent=5 // pred_check
        %p577 = pneg %p576
      $region50: #{tpu_custom_call.1} parent=5 // pred_check_branch
        %579 = sbr.rel (%p577) target = $region52
      $region51: #{tpu_custom_call.1} parent=5 // pred_region
        %s580 = ssub.s32 %s16, 2
        // Predicated region
        $region53: #{tpu_custom_call.1} parent=51 // pred_check
          %p581 = pneg %p113
        $region54: #{tpu_custom_call.1} parent=51 // pred_check_branch
          %583 = sbr.rel (%p581) target = $region56
        $region55: #{tpu_custom_call.1} parent=51 // pred_region
          %s584 = sand.u32 %s98, 1
          %s585 = scalar_lea.sflag [#allocation4], %s584
          %s586 = sand.u32 %s98, 1
          %s587 = smul.addr %s586, 32
          %s588 = scalar_lea.vmem [#allocation8], %s587
          %589 = dma.done %s585, 512
        $region56: #{tpu_custom_call.1} parent=51 // pred_fallthru
          _
      $region52: #{tpu_custom_call.1} parent=5 // pred_fallthru
        _
    $region6: #{tpu_custom_call.1} parent=1 // loop_footer
      %s20 = sadd.s32 1, %s16
    $region7: #{tpu_custom_call.1} parent=1 // loop_footer_branch
      %15 = sbr.rel target = $region3
    $region8: #{tpu_custom_call.1} parent=1 // loop_exit
      _
    %590 = vsyncpa [#allocation3], 1
    %s591 = scalar_lea.sflag [#allocation3], 1
    %592 = vsyncpa %s591, 1
    %593 = vsyncpa [#allocation6], 1
    %594 = vsyncpa [#allocation4], 1
    %s595 = scalar_lea.sflag [#allocation4], 1
    %596 = vsyncpa %s595, 1

</llo_original>
